<compile_context>
chip_gen: v5e
topology: v5e:2x2
jax: 0.10.0
libtpu: 0.0.40
codegen_flags: <defaults>
</compile_context>

<pallas_src>
import jax
import jax.numpy as jnp
from jax import lax
from jax.experimental import pallas as pl
from jax.experimental.pallas import tpu as pltpu

GEN_START = 2001
DISC_FACTOR = 1.0
DISC_WEIGHT = 0.5

_LANES = 128
_SUBLANES = 8
_SUB_ROWS = 2048                        # in-kernel compute chunk (1 MiB f32 temporaries)
_TARGET_BLOCK_BYTES = 8 * 1024 * 1024   # streamed DMA block (4-8 MiB v5e/v6e, 8-12 MiB v7x)
_NUM_CORES = 2                          # leading "parallel" axis; uses both v7x TCs,
                                        # runs serially (harmless) on 1-TC v5e/v6e.


def _round_up(x, m):
    return -(-x // m) * m


def _pad_grad_to_2d(x):
    """Tiny conv-weight-sized grads -> zero-padded (rows, 128) slab (rows % 8 == 0)."""
    flat = x.reshape(-1)
    n = flat.shape[0]
    rows = _round_up(-(-n // _LANES), _SUBLANES)
    padded = rows * _LANES
    if padded != n:
        flat = jnp.pad(flat, (0, padded - n))
    return flat.reshape(rows, _LANES)


def _logits_to_2d(x):
    """(rows, 128) view of the flattened logits.

    Contiguous reshape is a free bitcast (no HBM copy).  Only when numel is
    not a multiple of 128 do we pad the flat vector up to the next multiple
    of 128 (the one remaining copy path); we never pad up to block multiples:
    block raggedness is masked in-kernel instead.
    """
    flat = x.reshape(-1)
    n = flat.shape[0]
    rem = n % _LANES
    if rem:
        flat = jnp.pad(flat, (0, _LANES - rem))
    return flat.reshape(-1, _LANES)


def _make_kernel(*, block_rows, rows_total, nc, inv_count, disc_weight,
                 use_adaptive, mask_needed, fold):
    """All host-static scalars baked in via closure; disc_factor_eff comes via SMEM."""

    def kernel(logits_ref, nllg_ref, gg_ref, df_ref, wgl_ref, gl_ref, acc_ref):
        c = pl.program_id(0)            # core slice of the "parallel" axis
        i = pl.program_id(1)            # streaming ("arbitrary") axis

        @pl.when(i == 0)
        def _init():
            acc_ref[...] = jnp.zeros_like(acc_ref)

        blk = i * nc + c                # intended (unclamped) block id for this step

        if fold:
            def accumulate(apply_mask):
                for s in range(0, block_rows, _SUB_ROWS):
                    cur = min(_SUB_ROWS, block_rows - s)
                    x = logits_ref[pl.ds(s, cur), :].astype(jnp.float32)
                    if apply_mask:
                        gid = (blk * block_rows + s
                               + lax.broadcasted_iota(jnp.int32, (cur, _LANES), 0))
                        x = jnp.where(gid < rows_total, x, 0.0)
                    # Fold rows onto 8 sublanes with VPU adds only; the single
                    # cross-lane XLU reduce is deferred to the finalize step.
                    acc_ref[...] += jnp.sum(
                        x.reshape(cur // _SUBLANES, _SUBLANES, _LANES), axis=0)

            if mask_needed:
                in_bounds = (blk + 1) * block_rows <= rows_total

                @pl.when(in_bounds)
                def _fast():            # bulk blocks: no masking cost
                    accumulate(False)

                @pl.when(jnp.logical_not(in_bounds))
                def _edge():            # ragged / duplicated boundary blocks
                    accumulate(True)
            else:
                accumulate(False)
            partial_sum = None
        else:
            # Degenerate tiny input (< 8 rows): single block, direct reduce.
            partial_sum = jnp.sum(logits_ref[...].astype(jnp.float32))

        @pl.when(i == pl.num_programs(1) - 1)
        def _finalize():
            part = jnp.sum(acc_ref[...]) if fold else partial_sum
            g_part = -part * jnp.float32(inv_count)     # padded zeros contribute 0

            if use_adaptive:                            # trace-time branch
                nll = nllg_ref[...].astype(jnp.float32)
                gg = gg_ref[...].astype(jnp.float32)
                nll_norm = jnp.sqrt(jnp.sum(nll * nll))
                g_norm = jnp.sqrt(jnp.sum(gg * gg))
                d_weight = jnp.clip(nll_norm / (g_norm + 1e-4), 0.0, 1e4)
                d_weight = d_weight * jnp.float32(disc_weight)
            else:
                d_weight = jnp.float32(1.0)

            w_part = d_weight * df_ref[0] * g_part
            wgl_ref[...] = jnp.broadcast_to(w_part, (_SUBLANES, _LANES))
            gl_ref[...] = jnp.broadcast_to(g_part, (_SUBLANES, _LANES))

    return kernel


def generator_loss(logits_fake, nll_grads, g_grads, global_step,
                   gen_start=GEN_START, disc_factor=DISC_FACTOR,
                   disc_weight=DISC_WEIGHT, is_training=True,
                   target_block_bytes=_TARGET_BLOCK_BYTES):
    """Returns (weighted_gen_loss, g_loss) as f32 scalars."""
    del is_training  # torch reference accepts but ignores it; kept for API parity.

    total = int(logits_fake.size)
    itemsize = jnp.dtype(logits_fake.dtype).itemsize

    logits2d = _logits_to_2d(logits_fake)
    rows = int(logits2d.shape[0])

    # --- streamed-block sizing, by bytes (dtype aware) ---
    target_rows = max(_SUBLANES,
                      (int(target_block_bytes) // (_LANES * itemsize))
                      // _SUBLANES * _SUBLANES)
    if rows < _SUBLANES:
        block_rows, nblocks, nc, nsteps = rows, 1, 1, 1
        mask_needed, fold = False, False
    else:
        block_rows = min(target_rows, (rows // _SUBLANES) * _SUBLANES)
        nblocks = -(-rows // block_rows)
        nc = _NUM_CORES if nblocks >= 2 else 1
        nsteps = -(-nblocks // nc)
        mask_needed = (rows % block_rows != 0) or (nblocks % nc != 0)
        fold = True

    # --- tiny resident grad slabs (norms reduced once per core at finalize) ---
    nllg2d = _pad_grad_to_2d(nll_grads)
    gg2d = _pad_grad_to_2d(g_grads)

    # --- runtime scalar: adopt_weight(disc_factor, global_step) via SMEM ---
    if disc_factor is None:
        use_adaptive = False
        disc_factor_val = 0.0
    else:
        disc_factor_val = float(disc_factor)
        use_adaptive = disc_factor_val > 0.0
    df_eff = jnp.where(jnp.asarray(global_step) >= gen_start,
                       jnp.float32(disc_factor_val),
                       jnp.float32(0.0)).astype(jnp.float32).reshape(1)

    kernel = _make_kernel(block_rows=block_rows, rows_total=rows, nc=nc,
                          inv_count=1.0 / float(total),
                          disc_weight=float(disc_weight),
                          use_adaptive=use_adaptive,
                          mask_needed=mask_needed, fold=fold)

    block_bytes = block_rows * _LANES * itemsize
    slab_bytes = (nllg2d.size * nllg2d.dtype.itemsize
                  + gg2d.size * gg2d.dtype.itemsize)
    vmem_limit = int(min(64 << 20,
                         max(32 << 20, 2 * block_bytes + 4 * slab_bytes + (16 << 20))))

    # Clamp the block index ourselves so DMAs never go out of bounds; the mask
    # (based on the unclamped intended block) zeroes any duplicated block.
    logits_map = lambda c, i: (jnp.minimum(i * nc + c, nblocks - 1), 0)

    w_parts, g_parts = pl.pallas_call(
        kernel,
        out_shape=(jax.ShapeDtypeStruct((nc * _SUBLANES, _LANES), jnp.float32),
                   jax.ShapeDtypeStruct((nc * _SUBLANES, _LANES), jnp.float32)),
        grid_spec=pltpu.PrefetchScalarGridSpec(
            num_scalar_prefetch=0,
            grid=(nc, nsteps),
            in_specs=[
                pl.BlockSpec((block_rows, _LANES), logits_map),        # streamed logits
                pl.BlockSpec(nllg2d.shape, lambda c, i: (0, 0)),       # resident nll_grads
                pl.BlockSpec(gg2d.shape, lambda c, i: (0, 0)),         # resident g_grads
                pl.BlockSpec(memory_space=pltpu.MemorySpace.SMEM),     # disc_factor_eff
            ],
            out_specs=(
                pl.BlockSpec((_SUBLANES, _LANES), lambda c, i: (c, 0)),  # weighted partial
                pl.BlockSpec((_SUBLANES, _LANES), lambda c, i: (c, 0)),  # g_loss partial
            ),
            scratch_shapes=[pltpu.VMEM((_SUBLANES, _LANES), jnp.float32)],
        ),
        compiler_params=pltpu.CompilerParams(
            dimension_semantics=("parallel", "arbitrary"),
            vmem_limit_bytes=vmem_limit),
    )(logits2d, nllg2d, gg2d, df_eff)

    # Per-core partials are linear in the sum -> trivial 2-element combine.
    weighted_gen_loss = jnp.sum(w_parts.reshape(nc, -1)[:, 0])
    g_loss = jnp.sum(g_parts.reshape(nc, -1)[:, 0])
    return weighted_gen_loss, g_loss


def _reference(logits_fake, nll_grads, g_grads, global_step,
               gen_start=GEN_START, disc_factor=DISC_FACTOR,
               disc_weight=DISC_WEIGHT):
    g_loss = -jnp.mean(logits_fake.astype(jnp.float32))
    if disc_factor is not None and disc_factor > 0.0:
        d_weight = jnp.clip(
            jnp.linalg.norm(nll_grads.astype(jnp.float32).reshape(-1)) /
            (jnp.linalg.norm(g_grads.astype(jnp.float32).reshape(-1)) + 1e-4),
            0.0, 1e4) * disc_weight
    else:
        d_weight = jnp.float32(1.0)
    df = jnp.where(jnp.asarray(global_step) >= gen_start,
                   jnp.float32(0.0 if disc_factor is None else disc_factor),
                   jnp.float32(0.0))
    return d_weight * df * g_loss, g_loss


if __name__ == "__main__":
    key = jax.random.PRNGKey(0)
    k1, k2, k3, k4, k5, k6 = jax.random.split(key, 6)

    # Synthetic differentiable graph standing in for the autoencoder + disc so
    # that nll_loss and g_loss really depend on last_layer (final conv weight).
    N, H, W = 2, 16, 16
    C_OUT, C_IN, KH, KW = 4, 8, 3, 3

    feat = jax.random.normal(k1, (N * H * W, C_IN * KH * KW), jnp.float32)
    target = jax.random.normal(k2, (N * H * W, C_OUT), jnp.float32)
    disc_w = jax.random.normal(k3, (C_OUT, 1), jnp.float32)
    last_layer = 0.1 * jax.random.normal(k4, (C_OUT, C_IN, KH, KW), jnp.float32)

    def recon_fn(w):
        return feat @ w.reshape(C_OUT, -1).T

    def nll_loss_fn(w):
        return jnp.mean(jnp.abs(recon_fn(w) - target))

    def logits_fake_fn(w):
        return (recon_fn(w) @ disc_w).reshape(N, 1, H, W)

    def g_loss_fn(w):
        return -jnp.mean(logits_fake_fn(w))

    # TODO(synk): torch.autograd.grad equivalent done with jax.grad (plain-JAX glue).
    nll_grads = jax.grad(nll_loss_fn)(last_layer)
    g_grads = jax.grad(g_loss_fn)(last_layer)
    logits_fake = logits_fake_fn(last_layer)

    global_step = 3000  # >= gen_start -> disc_factor active

    # --- test 1: nominal shapes (tiny single-block path) ---
    w1, g1 = generator_loss(logits_fake, nll_grads, g_grads, global_step)
    jax.block_until_ready((w1, g1))
    w_ref, g_ref = _reference(logits_fake, nll_grads, g_grads, global_step)
    assert jnp.allclose(g1, g_ref, rtol=1e-5, atol=1e-6), (g1, g_ref)
    assert jnp.allclose(w1, w_ref, rtol=1e-5, atol=1e-6), (w1, w_ref)

    # --- test 2: bf16, multi-block + 2-way parallel axis + masked duplicate block ---
    logits_big = jax.random.normal(k5, (2, 3, 64, 64), jnp.bfloat16)
    w2, g2 = generator_loss(logits_big, nll_grads, g_grads, global_step,
                            target_block_bytes=16 * 1024)  # 3 blocks of 64 rows
    jax.block_until_ready((w2, g2))
    w2_ref, g2_ref = _reference(logits_big, nll_grads, g_grads, global_step)
    assert jnp.allclose(g2, g2_ref, rtol=1e-3, atol=1e-3), (g2, g2_ref)
    assert jnp.allclose(w2, w2_ref, rtol=1e-3, atol=1e-3), (w2, w2_ref)

    # --- test 3: ragged size (not a multiple of 128), row-masked boundary block ---
    logits_odd = jax.random.normal(k6, (3, 5, 7, 11), jnp.float32)   # 1155 elems
    w3, g3 = generator_loss(logits_odd, nll_grads, g_grads, global_step,
                            target_block_bytes=4096)                 # 8-row blocks
    jax.block_until_ready((w3, g3))
    w3_ref, g3_ref = _reference(logits_odd, nll_grads, g_grads, global_step)
    assert jnp.allclose(g3, g3_ref, rtol=1e-5, atol=1e-5), (g3, g3_ref)
    assert jnp.allclose(w3, w3_ref, rtol=1e-5, atol=1e-5), (w3, w3_ref)

    # --- test 4: pre-warmup step -> disc_factor adopted to 0 (runtime scalar) ---
    w4, g4 = generator_loss(logits_fake, nll_grads, g_grads, global_step=100)
    jax.block_until_ready((w4, g4))
    w4_ref, g4_ref = _reference(logits_fake, nll_grads, g_grads, 100)
    assert jnp.allclose(g4, g4_ref, rtol=1e-5, atol=1e-6), (g4, g4_ref)
    assert jnp.allclose(w4, w4_ref, rtol=1e-5, atol=1e-6), (w4, w4_ref)

    # --- test 5: jitted with a TRACED global_step (no trace-time bool conversion) ---
    jit_loss = jax.jit(lambda lf, ng, gg, step: generator_loss(lf, ng, gg, step))
    w5, g5 = jit_loss(logits_fake, nll_grads, g_grads, jnp.int32(3000))
    jax.block_until_ready((w5, g5))
    assert jnp.allclose(g5, g_ref, rtol=1e-5, atol=1e-6), (g5, g_ref)
    assert jnp.allclose(w5, w_ref, rtol=1e-5, atol=1e-6), (w5, w_ref)

    print("KERNEL_OK")
</pallas_src>

<mosaic_0001>
module attributes {stable_mosaic.version = 11 : i64} {
  func.func @kernel(%arg0: i32, %arg1: i32, %arg2: memref<4x128xf32, #tpu.memory_space<vmem>>, %arg3: memref<8x128xf32, #tpu.memory_space<vmem>>, %arg4: memref<8x128xf32, #tpu.memory_space<vmem>>, %arg5: memref<1xf32, #tpu.memory_space<smem>>, %arg6: memref<8x128xf32, #tpu.memory_space<vmem>>, %arg7: memref<8x128xf32, #tpu.memory_space<vmem>>, %arg8: memref<8x128xf32, #tpu.memory_space<vmem>>) attributes {dimension_semantics = [#tpu.dimension_semantics<parallel>, #tpu.dimension_semantics<arbitrary>], iteration_bounds = array<i64: 1, 1>, scalar_prefetch = 0 : i64, scratch_operands = 1 : i64, tpu.core_type = #tpu.core_type<tc>, window_params = [{transform_indices = @transform_0, window_bounds = array<i64: 4, 128>}, {pipeline_mode = #tpu.pipeline_mode<synchronous>, transform_indices = @transform_1, window_bounds = array<i64: 8, 128>}, {pipeline_mode = #tpu.pipeline_mode<synchronous>, transform_indices = @transform_2, window_bounds = array<i64: 8, 128>}, {transform_indices = @transform_3, window_bounds = array<i64: 1>}, {transform_indices = @transform_4, window_bounds = array<i64: 8, 128>}, {transform_indices = @transform_5, window_bounds = array<i64: 8, 128>}]} {
    %c0_i32 = arith.constant 0 : i32
    %0 = arith.cmpi eq, %arg1, %c0_i32 : i32
    %1 = arith.extui %0 : i1 to i32
    %c0_i32_0 = arith.constant 0 : i32
    %2 = arith.cmpi ne, %1, %c0_i32_0 : i32
    scf.if %2 {
      %cst_4 = arith.constant 0.000000e+00 : f32
      %11 = vector.broadcast %cst_4 : f32 to vector<8x128xf32>
      %c0_5 = arith.constant 0 : index
      %c0_6 = arith.constant 0 : index
      %12 = vector.load %arg8[%c0_5, %c0_6] : memref<8x128xf32, #tpu.memory_space<vmem>>, vector<8x128xf32>
      tpu.vector_store %arg8[%c0_5, %c0_6], %11 {strides = array<i32>} : memref<8x128xf32, #tpu.memory_space<vmem>>, vector<8x128xf32>,
    } else {
    }
    %c0 = arith.constant 0 : index
    %c0_1 = arith.constant 0 : index
    %3 = vector.load %arg2[%c0, %c0_1] : memref<4x128xf32, #tpu.memory_space<vmem>>, vector<4x128xf32>
    %4 = vector.shape_cast %3 : vector<4x128xf32> to vector<1x4x128xf32>
    %cst = arith.constant dense<0.000000e+00> : vector<1xf32>
    %5 = vector.multi_reduction <add>, %4, %cst [1, 2] : vector<1x4x128xf32> to vector<1xf32>
    %6 = vector.shape_cast %5 : vector<1xf32> to vector<1x1x1xf32>
    %7 = vector.extract %6[0, 0, 0] : f32 from vector<1x1x1xf32>
    %c0_i32_2 = arith.constant 0 : i32
    %8 = arith.cmpi eq, %arg1, %c0_i32_2 : i32
    %9 = arith.extui %8 : i1 to i32
    %c0_i32_3 = arith.constant 0 : i32
    %10 = arith.cmpi ne, %9, %c0_i32_3 : i32
    scf.if %10 {
      %cst_4 = arith.constant 0.000000e+00 : f32
      %11 = arith.subf %cst_4, %7 : f32
      %cst_5 = arith.constant 0.001953125 : f32
      %12 = arith.mulf %11, %cst_5 : f32
      %c0_6 = arith.constant 0 : index
      %c0_7 = arith.constant 0 : index
      %13 = vector.load %arg3[%c0_6, %c0_7] : memref<8x128xf32, #tpu.memory_space<vmem>>, vector<8x128xf32>
      %c0_8 = arith.constant 0 : index
      %c0_9 = arith.constant 0 : index
      %14 = vector.load %arg4[%c0_8, %c0_9] : memref<8x128xf32, #tpu.memory_space<vmem>>, vector<8x128xf32>
      %15 = arith.mulf %13, %13 : vector<8x128xf32>
      %16 = vector.shape_cast %15 : vector<8x128xf32> to vector<1x8x128xf32>
      %cst_10 = arith.constant dense<0.000000e+00> : vector<1xf32>
      %17 = vector.multi_reduction <add>, %16, %cst_10 [1, 2] : vector<1x8x128xf32> to vector<1xf32>
      %18 = vector.shape_cast %17 : vector<1xf32> to vector<1x1x1xf32>
      %19 = vector.extract %18[0, 0, 0] : f32 from vector<1x1x1xf32>
      %20 = math.sqrt %19 : f32
      %21 = arith.mulf %14, %14 : vector<8x128xf32>
      %22 = vector.shape_cast %21 : vector<8x128xf32> to vector<1x8x128xf32>
      %cst_11 = arith.constant dense<0.000000e+00> : vector<1xf32>
      %23 = vector.multi_reduction <add>, %22, %cst_11 [1, 2] : vector<1x8x128xf32> to vector<1xf32>
      %24 = vector.shape_cast %23 : vector<1xf32> to vector<1x1x1xf32>
      %25 = vector.extract %24[0, 0, 0] : f32 from vector<1x1x1xf32>
      %26 = math.sqrt %25 : f32
      %cst_12 = arith.constant 9.99999974E-5 : f32
      %27 = arith.addf %26, %cst_12 : f32
      %28 = arith.divf %20, %27 : f32
      %cst_13 = arith.constant 0.000000e+00 : f32
      %cst_14 = arith.constant 1.000000e+04 : f32
      %29 = arith.maximumf %cst_13, %28 : f32
      %30 = arith.minimumf %cst_14, %29 : f32
      %cst_15 = arith.constant 5.000000e-01 : f32
      %31 = arith.mulf %30, %cst_15 : f32
      %c0_16 = arith.constant 0 : index
      %32 = memref.load %arg5[%c0_16] : memref<1xf32, #tpu.memory_space<smem>>
      %33 = arith.mulf %31, %32 : f32
      %34 = arith.mulf %33, %12 : f32
      %35 = vector.broadcast %34 : f32 to vector<8x128xf32>
      %c0_17 = arith.constant 0 : index
      %c0_18 = arith.constant 0 : index
      %36 = vector.load %arg6[%c0_17, %c0_18] : memref<8x128xf32, #tpu.memory_space<vmem>>, vector<8x128xf32>
      tpu.vector_store %arg6[%c0_17, %c0_18], %35 {strides = array<i32>} : memref<8x128xf32, #tpu.memory_space<vmem>>, vector<8x128xf32>,
      %37 = vector.broadcast %12 : f32 to vector<8x128xf32>
      %c0_19 = arith.constant 0 : index
      %c0_20 = arith.constant 0 : index
      %38 = vector.load %arg7[%c0_19, %c0_20] : memref<8x128xf32, #tpu.memory_space<vmem>>, vector<8x128xf32>
      tpu.vector_store %arg7[%c0_19, %c0_20], %37 {strides = array<i32>} : memref<8x128xf32, #tpu.memory_space<vmem>>, vector<8x128xf32>,
    } else {
    }
    return
  }
  func.func @transform_0(%arg0: i32, %arg1: i32) -> (i32, i32) {
    %c1_i32 = arith.constant 1 : i32
    %0 = arith.muli %arg1, %c1_i32 : i32
    %1 = arith.addi %0, %arg0 : i32
    %c0_i32 = arith.constant 0 : i32
    %2 = arith.minsi %1, %c0_i32 : i32
    %c0_i32_0 = arith.constant 0 : i32
    %c0_i32_1 = arith.constant 0 : i32
    return %2, %c0_i32_0 : i32, i32
  }
  func.func @transform_1(%arg0: i32, %arg1: i32) -> (i32, i32) {
    %c0_i32 = arith.constant 0 : i32
    %c0_i32_0 = arith.constant 0 : i32
    %c0_i32_1 = arith.constant 0 : i32
    return %c0_i32, %c0_i32_0 : i32, i32
  }
  func.func @transform_2(%arg0: i32, %arg1: i32) -> (i32, i32) {
    %c0_i32 = arith.constant 0 : i32
    %c0_i32_0 = arith.constant 0 : i32
    %c0_i32_1 = arith.constant 0 : i32
    return %c0_i32, %c0_i32_0 : i32, i32
  }
  func.func @transform_3(%arg0: i32, %arg1: i32) -> i32 {
    %c0_i32 = arith.constant 0 : i32
    %c0_i32_0 = arith.constant 0 : i32
    return %c0_i32 : i32
  }
  func.func @transform_4(%arg0: i32, %arg1: i32) -> (i32, i32) {
    %c0_i32 = arith.constant 0 : i32
    %c0_i32_0 = arith.constant 0 : i32
    return %arg0, %c0_i32 : i32, i32
  }
  func.func @transform_5(%arg0: i32, %arg1: i32) -> (i32, i32) {
    %c0_i32 = arith.constant 0 : i32
    %c0_i32_0 = arith.constant 0 : i32
    return %arg0, %c0_i32 : i32, i32
  }
}

</mosaic_0001>

<llo_original>
// kernel: tpu_custom_call.1
$region0: #{tpu_custom_call.1}
  #allocation0 [shape = 'u32[]', space=smem, size = 0x4, offset = 0x4, fixed_abs, tag = 'smem constant byte address 0x4 - core index']
  #allocation1 [shape = 'u32[72,128]{1,0:T(1,128)}', space=vmem, size = 0x9000, scoped, tag = 'internal scratch']
  #allocation2 [shape = 'f32[8,128]{1,0:T(8,128)}', space=vmem, size = 0x1000, scoped, tag = 'scratch operand']
  #allocation3 [shape = 'f32[1]{0:T(128)S(6)}', space=smem, size = 0x200, scoped, tag = 'scoped memory for tpu_custom_call.1']
  %s0 = inlined_call_operand.hbm [shape: f32[4,128], index: 0, kind: input, shape index: {}]
  %s1 = inlined_call_operand.hbm [shape: f32[8,128], index: 1, kind: input, shape index: {}]
  %s2 = inlined_call_operand.hbm [shape: f32[8,128], index: 2, kind: input, shape index: {}]
  %s3 = inlined_call_operand.<no memory space> [shape: f32[1], index: 3, kind: input, shape index: {}]
  %s4 = inlined_call_operand.hbm [shape: f32[8,128], index: 4, kind: output, shape index: {0}]
  %s5 = inlined_call_operand.hbm [shape: f32[8,128], index: 5, kind: output, shape index: {1}]
  %6 = xla_tuple %s4, %s5
  %s7 = sld [smem:[#allocation0]]
  $region54: #{tpu_custom_call.1} parent=0
    _
  %s9 = ssub.s32 1, %s7
  %s10 = scalar_select 0, %s9, %s7
  %11 = sst [smem:[#allocation3]] %s3
  $region1: #{tpu_custom_call.1} parent=0
    #allocation4 [shape = 'u8[2048]{0}', space=vmem, size = 0x800, scoped, tag = 'input window, operand 0, single buffered']
    #allocation5 [shape = 's32[1]{0}', space=sflag, size = 0x4, scoped, tag = 'scoped memory for tpu_custom_call.1']
    #allocation6 [shape = 's32[1]{0}', space=sflag, size = 0x4, scoped, tag = 'scoped memory for tpu_custom_call.1']
    #allocation7 [shape = 'u8[4096]{0}', space=vmem, size = 0x1000, scoped, tag = 'input window, operand 1, single buffered']
    #allocation8 [shape = 's32[1]{0}', space=sflag, size = 0x4, scoped, tag = 'scoped memory for tpu_custom_call.1']
    #allocation9 [shape = 'u8[4096]{0}', space=vmem, size = 0x1000, scoped, tag = 'input window, operand 2, single buffered']
    #allocation10 [shape = 'u8[4096]{0}', space=vmem, size = 0x1000, scoped, tag = 'output window, operand 0, single buffered']
    #allocation11 [shape = 'u8[4096]{0}', space=vmem, size = 0x1000, scoped, tag = 'output window, operand 1, single buffered']
    #allocation12 [shape = 's32[1]{0}', space=sflag, size = 0x4, scoped, tag = 'scoped memory for tpu_custom_call.1']
    %12 = vsyncpa [#allocation5], 0
    %13 = vsyncpa [#allocation8], 0
    %14 = vsyncpa [#allocation6], 0
    %15 = vsyncpa [#allocation12], 0
    // Predicated region
    $region2: #{tpu_custom_call.1} parent=1 // pred_check
      _
    $region3: #{tpu_custom_call.1} parent=1 // pred_check_branch
      %17 = sbr.rel (0) target = $region5
    $region4: #{tpu_custom_call.1} parent=1 // pred_region
      %s18 = sadd.s32 0, 0
      %p19 = scmp.lt.s32.totalorder %s18, 0
      %s20 = scalar_select %p19, %s18, 0
      %22 = vsyncadd [#allocation5], 0
      %s23 = smul.addr %s20, 4
      %s24 = scalar_lea.hbm %s0, %s23
      %s26 = sshll.u32 %s24, 4
      %s27 = int_to_ptr.hbm [resolvable:$true] %s26
      %s28 = sshll.u32 [#allocation4], 4
      %s29 = int_to_ptr.vmem [resolvable:$true] %s28
      %31 = dma.hbm_to_vmem [thread:$0]  %s27, 64, %s29, [#allocation5]
    $region5: #{tpu_custom_call.1} parent=1 // pred_fallthru
      _
    // Predicated region
    $region6: #{tpu_custom_call.1} parent=1 // pred_check
      _
    $region7: #{tpu_custom_call.1} parent=1 // pred_check_branch
      %33 = sbr.rel (0) target = $region9
    $region8: #{tpu_custom_call.1} parent=1 // pred_region
      %35 = vsyncadd [#allocation8], 0
      %s37 = sshll.u32 %s1, 4
      %s38 = int_to_ptr.hbm [resolvable:$true] %s37
      %s39 = sshll.u32 [#allocation7], 4
      %s40 = int_to_ptr.vmem [resolvable:$true] %s39
      %42 = dma.hbm_to_vmem [thread:$0]  %s38, 128, %s40, [#allocation8]
    $region9: #{tpu_custom_call.1} parent=1 // pred_fallthru
      _
    // Predicated region
    $region10: #{tpu_custom_call.1} parent=1 // pred_check
      _
    $region11: #{tpu_custom_call.1} parent=1 // pred_check_branch
      %44 = sbr.rel (0) target = $region13
    $region12: #{tpu_custom_call.1} parent=1 // pred_region
      %46 = vsyncadd [#allocation8], 0
      %s48 = sshll.u32 %s2, 4
      %s49 = int_to_ptr.hbm [resolvable:$true] %s48
      %s50 = sshll.u32 [#allocation9], 4
      %s51 = int_to_ptr.vmem [resolvable:$true] %s50
      %53 = dma.hbm_to_vmem [thread:$0]  %s49, 128, %s51, [#allocation8]
    $region13: #{tpu_custom_call.1} parent=1 // pred_fallthru
      _
    // Predicated region
    $region14: #{tpu_custom_call.1} parent=1 // pred_check
      _
    $region15: #{tpu_custom_call.1} parent=1 // pred_check_branch
      %55 = sbr.rel (0) target = $region17
    $region16: #{tpu_custom_call.1} parent=1 // pred_region
      _
    $region17: #{tpu_custom_call.1} parent=1 // pred_fallthru
      _
    // Predicated region
    $region18: #{tpu_custom_call.1} parent=1 // pred_check
      _
    $region19: #{tpu_custom_call.1} parent=1 // pred_check_branch
      %57 = sbr.rel (0) target = $region21
    $region20: #{tpu_custom_call.1} parent=1 // pred_region
      %59 = dma.done [#allocation5], 64
    $region21: #{tpu_custom_call.1} parent=1 // pred_fallthru
      _
    // Predicated region
    $region22: #{tpu_custom_call.1} parent=1 // pred_check
      _
    $region23: #{tpu_custom_call.1} parent=1 // pred_check_branch
      %61 = sbr.rel (0) target = $region25
    $region24: #{tpu_custom_call.1} parent=1 // pred_region
      %63 = dma.done [#allocation8], 128
    $region25: #{tpu_custom_call.1} parent=1 // pred_fallthru
      _
    // Predicated region
    $region26: #{tpu_custom_call.1} parent=1 // pred_check
      _
    $region27: #{tpu_custom_call.1} parent=1 // pred_check_branch
      %65 = sbr.rel (0) target = $region29
    $region28: #{tpu_custom_call.1} parent=1 // pred_region
      %67 = dma.done [#allocation8], 128
    $region29: #{tpu_custom_call.1} parent=1 // pred_fallthru
      _
    %s68 = sadd.s32 0, 0
    %p69 = scmp.lt.s32.totalorder %s68, 0
    %s70 = scalar_select %p69, %s68, 0
    %p71 = scmp.eq.s32.totalorder 0, 0
    // Predicated region
    $region30: #{tpu_custom_call.1} parent=1 // pred_check
      %p72 = pneg %p71
    $region31: #{tpu_custom_call.1} parent=1 // pred_check_branch
      %74 = sbr.rel (%p72) target = $region33
    $region32: #{tpu_custom_call.1} parent=1 // pred_region
      %75 = vst [vmem:[#allocation2] sm:$0xff] 0.0
    $region33: #{tpu_custom_call.1} parent=1 // pred_fallthru
      _
    %v76 = vld [vmem:[#allocation4] sm:$0xf]
    %vm77 = vcmask 1043456
    %v78 = vsel %vm77, %v76, 0.0
    %79 = vadd.xlane.f32.xlu0 %v78
    %v80 = vpop.xlane.xlu0 %79
    %v81 = vrot.slane %v80, 4
    %v82 = vadd.f32 %v80, %v81
    %v83 = vrot.slane %v82, 2
    %v84 = vadd.f32 %v82, %v83
    %v85 = vrot.slane %v84, 1
    %v86 = vadd.f32 %v84, %v85
    %s87 = vtos %v86
    // Predicated region
    $region34: #{tpu_custom_call.1} parent=1 // pred_check
      %p88 = pneg %p71
    $region35: #{tpu_custom_call.1} parent=1 // pred_check_branch
      %90 = sbr.rel (%p88) target = $region37
    $region36: #{tpu_custom_call.1} parent=1 // pred_region
      %s91 = ssub.f32 0.0, %s87
      %s92 = smul.f32 %s91, 0.001953125
      %v93 = vld [vmem:[#allocation7] sm:$0xff]
      %v94 = vld [vmem:[#allocation9] sm:$0xff]
      %v95 = vmul.f32 %v93, %v93
      %96 = vadd.xlane.f32.xlu0 %v95
      %v97 = vpop.xlane.xlu0 %96
      %v98 = vrot.slane %v97, 4
      %v99 = vadd.f32 %v97, %v98
      %v100 = vrot.slane %v99, 2
      %v101 = vadd.f32 %v99, %v100
      %v102 = vrot.slane %v101, 1
      %v103 = vadd.f32 %v101, %v102
      %s104 = vtos %v103
      %v105 = vstv %s104
      %v106 = vrsqrt.pop %v105
      %v107 = vmul.f32 %v106, %v105
      %v108 = vmul.f32 %v107, %v106
      %v109 = vmul.f32 0.5, %v108
      %v110 = vsub.f32 1.5, %v109
      %v111 = vmul.f32 %v106, %v110
      %v112 = vmul.f32 %v105, %v111
      %vm113 = vcmp.eq.f32.partialorder %v105, inf
      %v114 = vsel %vm113, %v105, %v112
      %vm115 = vcmp.eq.f32.partialorder %v105, 0.0
      %v116 = vand.u32 %v105, 2147483648
      %v117 = vsel %vm115, %v116, %v114
      %s118 = vtos %v117
      %v119 = vmul.f32 %v94, %v94
      %120 = vadd.xlane.f32.xlu0 %v119
      %v121 = vpop.xlane.xlu0 %120
      %v122 = vrot.slane %v121, 4
      %v123 = vadd.f32 %v121, %v122
      %v124 = vrot.slane %v123, 2
      %v125 = vadd.f32 %v123, %v124
      %v126 = vrot.slane %v125, 1
      %v127 = vadd.f32 %v125, %v126
      %s128 = vtos %v127
      %v129 = vstv %s128
      %v130 = vrsqrt.pop %v129
      %v131 = vmul.f32 %v130, %v129
      %v132 = vmul.f32 %v131, %v130
      %v133 = vmul.f32 0.5, %v132
      %v134 = vsub.f32 1.5, %v133
      %v135 = vmul.f32 %v130, %v134
      %v136 = vmul.f32 %v129, %v135
      %vm137 = vcmp.eq.f32.partialorder %v129, inf
      %v138 = vsel %vm137, %v129, %v136
      %vm139 = vcmp.eq.f32.partialorder %v129, 0.0
      %v140 = vand.u32 %v129, 2147483648
      %v141 = vsel %vm139, %v140, %v138
      %s142 = vtos %v141
      %s143 = sadd.f32 %s142, 0.0001
      %v144 = vstv %s143
      %v145 = vrcp.pop %v144
      %v146 = vmul.f32 %v144, %v145
      %v147 = vsub.f32 1.0, %v146
      %v148 = vmul.f32 %v145, %v147
      %v149 = vadd.f32 %v145, %v148
      %vm150 = vweird.f32 %v144
      %vm151 = vweird.f32 %v145
      %vm152 = vmor %vm150, %vm151
      %v153 = vsel %vm152, %v145, %v149
      %v154 = vand.u32 2147483647, %v144
      %vm155 = vcmp.eq.f32.partialorder %v154, 8.507059e+37
      %v156 = vand.u32 %v144, 2147483648
      %v157 = vor.u32 1.1754944e-38, %v156
      %v158 = vsel %vm155, %v157, %v153
      %s159 = vtos %v158
      %s160 = smul.f32 %s118, %s159
      %s161 = smax.f32 %s160, 0.0
      %s162 = smin.f32 %s161, 10000.0
      %s163 = smul.f32 %s162, 0.5
      %s164 = sld [smem:[#allocation3]]
      %s165 = smul.f32 %s163, %s164
      %s166 = smul.f32 %s165, %s92
      %v167 = vstv %s166
      %168 = vst [vmem:[#allocation10] sm:$0xff] %v167
      %v169 = vstv %s92
      %170 = vst [vmem:[#allocation11] sm:$0xff] %v169
    $region37: #{tpu_custom_call.1} parent=1 // pred_fallthru
      _
    // Predicated region
    $region38: #{tpu_custom_call.1} parent=1 // pred_check
      _
    $region39: #{tpu_custom_call.1} parent=1 // pred_check_branch
      %172 = sbr.rel (0) target = $region41
    $region40: #{tpu_custom_call.1} parent=1 // pred_region
      %174 = vsyncadd [#allocation6], 0
      %s176 = sshll.u32 [#allocation10], 4
      %s177 = int_to_ptr.vmem [resolvable:$true] %s176
      %s178 = sshll.u32 %s4, 4
      %s179 = int_to_ptr.hbm [resolvable:$true] %s178
      %181 = dma.vmem_to_hbm [thread:$0]  %s177, 128, %s179, [#allocation6]
    $region41: #{tpu_custom_call.1} parent=1 // pred_fallthru
      _
    // Predicated region
    $region42: #{tpu_custom_call.1} parent=1 // pred_check
      _
    $region43: #{tpu_custom_call.1} parent=1 // pred_check_branch
      %183 = sbr.rel (0) target = $region45
    $region44: #{tpu_custom_call.1} parent=1 // pred_region
      %185 = vsyncadd [#allocation12], 0
      %s187 = sshll.u32 [#allocation11], 4
      %s188 = int_to_ptr.vmem [resolvable:$true] %s187
      %s189 = sshll.u32 %s5, 4
      %s190 = int_to_ptr.hbm [resolvable:$true] %s189
      %192 = dma.vmem_to_hbm [thread:$0]  %s188, 128, %s190, [#allocation12]
    $region45: #{tpu_custom_call.1} parent=1 // pred_fallthru
      _
    // Predicated region
    $region46: #{tpu_custom_call.1} parent=1 // pred_check
      _
    $region47: #{tpu_custom_call.1} parent=1 // pred_check_branch
      %194 = sbr.rel (0) target = $region49
    $region48: #{tpu_custom_call.1} parent=1 // pred_region
      %196 = dma.done [#allocation6], 128
    $region49: #{tpu_custom_call.1} parent=1 // pred_fallthru
      _
    // Predicated region
    $region50: #{tpu_custom_call.1} parent=1 // pred_check
      _
    $region51: #{tpu_custom_call.1} parent=1 // pred_check_branch
      %198 = sbr.rel (0) target = $region53
    $region52: #{tpu_custom_call.1} parent=1 // pred_region
      %200 = dma.done [#allocation12], 128
    $region53: #{tpu_custom_call.1} parent=1 // pred_fallthru
      _
    %201 = vsyncpa [#allocation5], 1
    %202 = vsyncpa [#allocation8], 1
    %203 = vsyncpa [#allocation6], 1
    %204 = vsyncpa [#allocation12], 1

</llo_original>
